<compile_context>
chip_gen: v6e
topology: v6e:2x2x1
jax: 0.10.0
libtpu: 0.0.40
codegen_flags: <defaults>
</compile_context>

<pallas_src>
import math

import jax
import jax.numpy as jnp
from jax.experimental import pallas as pl
from jax.experimental.pallas import tpu as pltpu


# --------------------------------------------------------------------------
# PE table construction (matches the PyTorch __init__ exactly, incl. odd dim)
# --------------------------------------------------------------------------
def make_sinusoidal_pe(max_len, dim_model):
    position = jnp.arange(max_len, dtype=jnp.float32)[:, None]            # [L, 1]
    div_term = jnp.exp(jnp.arange(0, dim_model, 2, dtype=jnp.float32)
                       * (-math.log(10000.0) / dim_model))                # [ceil(D/2)]
    angles = position * div_term                                          # [L, ceil(D/2)]
    if dim_model % 2 == 0:
        pe = jnp.zeros((max_len, dim_model), jnp.float32)
        pe = pe.at[:, 0::2].set(jnp.sin(angles))
        pe = pe.at[:, 1::2].set(jnp.cos(angles))
    else:
        pe = jnp.zeros((max_len, dim_model + 1), jnp.float32)
        pe = pe.at[:, 0::2].set(jnp.sin(angles))
        pe = pe.at[:, 1::2].set(jnp.cos(angles))
        pe = pe[:, :-1]
    return pe                                                             # [L, D]


def make_learnable_pe(key, max_len, dim_model):
    # nn.Parameter(torch.randn(1, max_len, dim_model)) -> stored as [L, D]
    return jax.random.normal(key, (max_len, dim_model), jnp.float32)


# --------------------------------------------------------------------------
# Kernel: one (bt, tc) tile of flattened x plus the matching (1, tc) PE slab
# --------------------------------------------------------------------------
def pos_enc_kernel(x_ref, pe_ref, o_ref):
    # x_ref / o_ref: (bt, tc); pe_ref: (1, tc).  Implicit sublane broadcast,
    # pure 2-load/1-store VPU add -> strictly HBM-bound.
    o_ref[...] = x_ref[...] + pe_ref[...]


# --------------------------------------------------------------------------
# Tile selection from a VMEM budget
# --------------------------------------------------------------------------
def _round_down(x, m):
    return (x // m) * m


def _choose_tiles(B, SD, itemsize, target_block_bytes):
    # Column (lane) tile: multiple of 128, or the full flattened extent.
    if SD <= 128:
        tc = SD
    else:
        tc = _round_down(min(SD, max(128, target_block_bytes // (8 * itemsize))), 128)
        if tc >= SD:
            tc = SD            # full extent is always a legal block shape
    # Batch (sublane) tile: multiple of 8, or the full batch.
    if B <= 8:
        bt = B
    else:
        bt_cap = _round_down(B, 8)                       # largest mult. of 8 <= B
        bt = max(8, _round_down(target_block_bytes // (tc * itemsize), 8))
        bt = min(bt, bt_cap)
    return bt, tc


# --------------------------------------------------------------------------
# Wrapper
# --------------------------------------------------------------------------
def positional_encoding_forward(x, pe, *, target_block_bytes=2 * 1024 * 1024):
    """x: [B, S, D]; pe: [max_len, D] (sinusoidal buffer or learnable param)."""
    B, S, D = x.shape
    # Slice to seq_len and cast once (in a real module this cast lives at init).
    pe_s = pe[:S, :].astype(x.dtype)                     # (S, D)

    SD = S * D
    itemsize = jnp.dtype(x.dtype).itemsize
    x2 = x.reshape(B, SD)                                # lane-dense layout
    pe2 = pe_s.reshape(1, SD)

    bt, tc = _choose_tiles(B, SD, itemsize, target_block_bytes)
    n_col = pl.cdiv(SD, tc)
    n_bat = pl.cdiv(B, bt)

    # VMEM: double-buffered x, out (bt*tc each) + pe (1*tc), plus headroom.
    block_bytes = (2 * bt * tc + tc) * itemsize
    vmem_limit = int(min(max(4 * 2 * block_bytes, 16 * 1024 * 1024),
                         48 * 1024 * 1024))

    out2 = pl.pallas_call(
        pos_enc_kernel,
        out_shape=jax.ShapeDtypeStruct((B, SD), x.dtype),
        grid=(n_col, n_bat),                             # column axis outer -> pe
        in_specs=[                                       # block idx constant over
            pl.BlockSpec((bt, tc), lambda j, i: (i, j)),  # the inner batch loop
            pl.BlockSpec((1, tc), lambda j, i: (0, j)),
        ],
        out_specs=pl.BlockSpec((bt, tc), lambda j, i: (i, j)),
        compiler_params=pltpu.CompilerParams(
            dimension_semantics=("parallel", "parallel"),
            vmem_limit_bytes=vmem_limit,
        ),
    )(x2, pe2)
    return out2.reshape(B, S, D)


# --------------------------------------------------------------------------
# Demo / self-check
# --------------------------------------------------------------------------
if __name__ == "__main__":
    key = jax.random.PRNGKey(0)
    k1, k2, k3, k4 = jax.random.split(key, 4)

    # ---- case 1: fixed sinusoidal PE, even dim_model ----
    B, S, D, max_len = 2, 8, 32, 64
    x = jax.random.normal(k1, (B, S, D), jnp.float32)
    pe = make_sinusoidal_pe(max_len, D)
    out = positional_encoding_forward(x, pe)
    jax.block_until_ready(out)
    ref = x + pe[None, :S, :]
    assert out.shape == (B, S, D) and out.dtype == jnp.float32
    assert jnp.allclose(out, ref, atol=1e-6, rtol=1e-6)

    # ---- case 2: fixed sinusoidal PE, odd dim_model (pad-then-trim branch) ----
    D_odd = 7
    x_odd = jax.random.normal(k2, (B, S, D_odd), jnp.float32)
    pe_odd = make_sinusoidal_pe(max_len, D_odd)
    out_odd = positional_encoding_forward(x_odd, pe_odd)
    jax.block_until_ready(out_odd)
    ref_odd = x_odd + pe_odd[None, :S, :]
    assert jnp.allclose(out_odd, ref_odd, atol=1e-6, rtol=1e-6)

    # ---- case 3: learnable PE (forward is the same broadcast-add) ----
    pe_learn = make_learnable_pe(k3, max_len, D)
    out_learn = positional_encoding_forward(x, pe_learn)
    jax.block_until_ready(out_learn)
    ref_learn = x + pe_learn[None, :S, :]
    assert jnp.allclose(out_learn, ref_learn, atol=1e-6, rtol=1e-6)

    # ---- case 4: multi-block grid + padded last batch block (B % 8 != 0),
    #      forcing small column tiles to exercise the 2-D tiling/masking path.
    B4, S4, D4 = 9, 16, 128
    x4 = jax.random.normal(k4, (B4, S4, D4), jnp.float32)
    pe4 = make_sinusoidal_pe(64, D4)
    out4 = positional_encoding_forward(x4, pe4, target_block_bytes=4096)
    jax.block_until_ready(out4)
    ref4 = x4 + pe4[None, :S4, :]
    assert jnp.allclose(out4, ref4, atol=1e-6, rtol=1e-6)

    assert bool(jnp.all(jnp.isfinite(out)))
    print("KERNEL_OK")
</pallas_src>

<mosaic_0001>
module attributes {stable_mosaic.version = 11 : i64} {
  func.func @pos_enc_kernel(%arg0: i32, %arg1: i32, %arg2: memref<2x256xf32, #tpu.memory_space<vmem>>, %arg3: memref<1x256xf32, #tpu.memory_space<vmem>>, %arg4: memref<2x256xf32, #tpu.memory_space<vmem>>) attributes {dimension_semantics = [#tpu.dimension_semantics<parallel>, #tpu.dimension_semantics<parallel>], iteration_bounds = array<i64: 1, 1>, scalar_prefetch = 0 : i64, scratch_operands = 0 : i64, tpu.core_type = #tpu.core_type<tc>, window_params = [{transform_indices = @transform_0, window_bounds = array<i64: 2, 256>}, {transform_indices = @transform_1, window_bounds = array<i64: 1, 256>}, {transform_indices = @transform_2, window_bounds = array<i64: 2, 256>}]} {
    %c0 = arith.constant 0 : index
    %c0_0 = arith.constant 0 : index
    %0 = vector.load %arg2[%c0, %c0_0] : memref<2x256xf32, #tpu.memory_space<vmem>>, vector<2x256xf32>
    %c0_1 = arith.constant 0 : index
    %c0_2 = arith.constant 0 : index
    %1 = vector.load %arg3[%c0_1, %c0_2] : memref<1x256xf32, #tpu.memory_space<vmem>>, vector<1x256xf32>
    %2 = vector.broadcast %1 : vector<1x256xf32> to vector<2x256xf32>
    %3 = arith.addf %0, %2 : vector<2x256xf32>
    %c0_3 = arith.constant 0 : index
    %c0_4 = arith.constant 0 : index
    %4 = vector.load %arg4[%c0_3, %c0_4] : memref<2x256xf32, #tpu.memory_space<vmem>>, vector<2x256xf32>
    tpu.vector_store %arg4[%c0_3, %c0_4], %3 {strides = array<i32>} : memref<2x256xf32, #tpu.memory_space<vmem>>, vector<2x256xf32>,
    return
  }
  func.func @transform_0(%arg0: i32, %arg1: i32) -> (i32, i32) {
    %c0_i32 = arith.constant 0 : i32
    return %arg1, %arg0 : i32, i32
  }
  func.func @transform_1(%arg0: i32, %arg1: i32) -> (i32, i32) {
    %c0_i32 = arith.constant 0 : i32
    %c0_i32_0 = arith.constant 0 : i32
    return %c0_i32, %arg0 : i32, i32
  }
  func.func @transform_2(%arg0: i32, %arg1: i32) -> (i32, i32) {
    %c0_i32 = arith.constant 0 : i32
    return %arg1, %arg0 : i32, i32
  }
}

</mosaic_0001>

<llo_original>
// kernel: tpu_custom_call.1
$region0: #{tpu_custom_call.1}
  #allocation0 [shape = 'u32[]', space=smem, size = 0x4, offset = 0x4, fixed_abs, tag = 'smem constant byte address 0x4 - core index']
  #allocation1 [shape = 'u32[144,128]{1,0:T(1,128)}', space=vmem, size = 0x12000, scoped, tag = 'internal scratch']
  %s0 = inlined_call_operand.hbm [shape: f32[2,256], index: 0, kind: input, shape index: {}]
  %s1 = inlined_call_operand.hbm [shape: f32[1,256], index: 1, kind: input, shape index: {}]
  %s2 = inlined_call_operand.hbm [shape: f32[2,256], index: 2, kind: output, shape index: {}]
  %s3 = sld [smem:[#allocation0]]
  $region26: #{tpu_custom_call.1} parent=0
    _
  %s5 = ssub.s32 1, %s3
  %s6 = scalar_select 0, %s5, %s3
  $region1: #{tpu_custom_call.1} parent=0
    #allocation2 [shape = 'u8[2048]{0}', space=vmem, size = 0x800, scoped, tag = 'input window, operand 0, single buffered']
    #allocation3 [shape = 's32[1]{0}', space=sflag, size = 0x4, scoped, tag = 'scoped memory for tpu_custom_call.1']
    #allocation4 [shape = 's32[1]{0}', space=sflag, size = 0x4, scoped, tag = 'scoped memory for tpu_custom_call.1']
    #allocation5 [shape = 'u8[1024]{0}', space=vmem, size = 0x400, scoped, tag = 'input window, operand 1, single buffered']
    #allocation6 [shape = 's32[1]{0}', space=sflag, size = 0x4, scoped, tag = 'scoped memory for tpu_custom_call.1']
    #allocation7 [shape = 'u8[2048]{0}', space=vmem, size = 0x800, scoped, tag = 'output window, operand 0, single buffered']
    %7 = vsyncpa [#allocation3], 0
    %8 = vsyncpa [#allocation6], 0
    %9 = vsyncpa [#allocation4], 0
    // Predicated region
    $region2: #{tpu_custom_call.1} parent=1 // pred_check
      _
    $region3: #{tpu_custom_call.1} parent=1 // pred_check_branch
      %11 = sbr.rel (0) target = $region5
    $region4: #{tpu_custom_call.1} parent=1 // pred_region
      %s13 = ssub.s32 64, 64
      %14 = vsyncadd [#allocation3], %s13
      %s16 = sshll.u32 [#allocation2], 4
      %s17 = int_to_ptr.vmem [resolvable:$true] %s16
      %19 = dma.hbm_to_vmem [thread:$0]  %s0, 64, %s17, [#allocation3]
    $region5: #{tpu_custom_call.1} parent=1 // pred_fallthru
      _
    // Predicated region
    $region6: #{tpu_custom_call.1} parent=1 // pred_check
      _
    $region7: #{tpu_custom_call.1} parent=1 // pred_check_branch
      %21 = sbr.rel (0) target = $region9
    $region8: #{tpu_custom_call.1} parent=1 // pred_region
      %s23 = ssub.s32 32, 32
      %24 = vsyncadd [#allocation6], %s23
      %s26 = sshll.u32 [#allocation5], 4
      %s27 = int_to_ptr.vmem [resolvable:$true] %s26
      %29 = dma.hbm_to_vmem [thread:$0]  %s1, 32, %s27, [#allocation6]
    $region9: #{tpu_custom_call.1} parent=1 // pred_fallthru
      _
    // Predicated region
    $region10: #{tpu_custom_call.1} parent=1 // pred_check
      _
    $region11: #{tpu_custom_call.1} parent=1 // pred_check_branch
      %31 = sbr.rel (0) target = $region13
    $region12: #{tpu_custom_call.1} parent=1 // pred_region
      %32 = dma.done [#allocation3], 64
    $region13: #{tpu_custom_call.1} parent=1 // pred_fallthru
      _
    // Predicated region
    $region14: #{tpu_custom_call.1} parent=1 // pred_check
      _
    $region15: #{tpu_custom_call.1} parent=1 // pred_check_branch
      %34 = sbr.rel (0) target = $region17
    $region16: #{tpu_custom_call.1} parent=1 // pred_region
      %35 = dma.done [#allocation6], 32
    $region17: #{tpu_custom_call.1} parent=1 // pred_fallthru
      _
    %v36 = vld [vmem:[#allocation2] sm:$0xf]
    %v37 = vld [vmem:[#allocation5] sm:$0x3]
    %v39 = vlaneseq
    %v40 = vshrl.u32 %v39, 7
    %v41 = vsub.s32 0, %v40
    %v42 = vrot.slane %v37, %v41
    %v43 = vlaneseq
    %v44 = vshrl.u32 %v43, 7
    %v45 = vsub.s32 1, %v44
    %v46 = vrot.slane %v37, %v45
    %v47 = vcombine.low %v42, %v46
    %v49 = vunpack.c.l.s4 1983009808
    %v50 = vunpack.c.0.s8 %v49
    %v51 = vlaneseq
    %v52 = vshrl.u32 %v51, 7
    %v53 = vsub.s32 %v50, %v52
    %v54 = vrot.slane %v47, %v53
    %v56 = vadd.f32 %v36, %v54
    %57 = vst [vmem:[#allocation7] sm:$0xf] %v56
    // Predicated region
    $region18: #{tpu_custom_call.1} parent=1 // pred_check
      _
    $region19: #{tpu_custom_call.1} parent=1 // pred_check_branch
      %59 = sbr.rel (0) target = $region21
    $region20: #{tpu_custom_call.1} parent=1 // pred_region
      %s61 = ssub.s32 64, 64
      %62 = vsyncadd [#allocation4], %s61
      %s64 = sshll.u32 [#allocation7], 4
      %s65 = int_to_ptr.vmem [resolvable:$true] %s64
      %67 = dma.vmem_to_hbm [thread:$0]  %s65, 64, %s2, [#allocation4]
    $region21: #{tpu_custom_call.1} parent=1 // pred_fallthru
      _
    // Predicated region
    $region22: #{tpu_custom_call.1} parent=1 // pred_check
      _
    $region23: #{tpu_custom_call.1} parent=1 // pred_check_branch
      %69 = sbr.rel (0) target = $region25
    $region24: #{tpu_custom_call.1} parent=1 // pred_region
      %70 = dma.done [#allocation4], 64
    $region25: #{tpu_custom_call.1} parent=1 // pred_fallthru
      _
    %71 = vsyncpa [#allocation3], 1
    %72 = vsyncpa [#allocation6], 1
    %73 = vsyncpa [#allocation4], 1

</llo_original>
